<compile_context>
chip_gen: v7x
topology: tpu7x:2x2x1
jax: 0.10.0
libtpu: 0.0.40
codegen_flags: <defaults>
</compile_context>

<pallas_src>
import functools

import jax
import jax.numpy as jnp
from jax.experimental import pallas as pl
from jax.experimental.pallas import tpu as pltpu


def _series_decomp_kernel(x_ref, res_ref, mean_ref, *, kernel_size, front):
    # x_ref / res_ref / mean_ref: (L, TN) blocks.  Moving average runs along
    # axis 0 (time, sublanes); lanes carry batch*channel.
    x = x_ref[...]
    L, tn = x.shape
    xf = x.astype(jnp.float32)

    first = xf[0:1, :]          # (1, TN) replicate-pad rows
    last = xf[L - 1:L, :]
    end = kernel_size - 1 - front

    pieces = []
    if front > 0:
        pieces.append(jnp.broadcast_to(first, (front, tn)))
    pieces.append(xf)
    if end > 0:
        pieces.append(jnp.broadcast_to(last, (end, tn)))
    xp = jnp.concatenate(pieces, axis=0) if len(pieces) > 1 else xf  # (L+k-1, TN)

    # k shifted adds (static offsets, fully unrolled) accumulated in f32.
    acc = xp[0:L, :]
    for j in range(1, kernel_size):
        acc = acc + xp[j:j + L, :]
    mean = acc * (1.0 / kernel_size)

    mean_ref[...] = mean.astype(mean_ref.dtype)
    res_ref[...] = (xf - mean).astype(res_ref.dtype)


def _round_up(a, m):
    return ((a + m - 1) // m) * m


def series_decomp(x, kernel_size):
    """Equivalent of SeriesDecomp(kernel_size)(x) for x of shape (B, L, C).

    Returns (res, moving_mean), both shaped (B, L, C) with x.dtype.
    """
    B, L, C = x.shape
    k = int(kernel_size)
    assert k >= 1
    front = k - 1 - (k - 1) // 2

    # Lane-dense layout: time on sublanes, batch*channel on lanes.
    N = B * C
    x2 = jnp.transpose(x, (1, 0, 2)).reshape(L, N)

    LANE_TILE = 512
    if N <= LANE_TILE:
        N_pad = _round_up(N, 128)
        TN = N_pad
    else:
        N_pad = _round_up(N, LANE_TILE)
        TN = LANE_TILE
    if N_pad != N:
        x2 = jnp.pad(x2, ((0, 0), (0, N_pad - N)))

    grid = (N_pad // TN,)
    out_sd = jax.ShapeDtypeStruct((L, N_pad), x.dtype)

    itemsize = jnp.dtype(x.dtype).itemsize
    flops = (k + 2) * L * N_pad
    bytes_accessed = 3 * L * N_pad * itemsize

    # VMEM budget: double-buffered input + two double-buffered outputs plus
    # the in-register/VMEM padded working slab; capped at v7x physical VMEM.
    block_bytes = L * TN * max(itemsize, 4)
    vmem_limit = int(min(64 * 1024 * 1024, max(32 * 1024 * 1024, 10 * block_bytes)))

    kernel = functools.partial(_series_decomp_kernel, kernel_size=k, front=front)

    res2, mean2 = pl.pallas_call(
        kernel,
        out_shape=(out_sd, out_sd),
        grid=grid,
        in_specs=[pl.BlockSpec((L, TN), lambda n: (0, n))],
        out_specs=(
            pl.BlockSpec((L, TN), lambda n: (0, n)),
            pl.BlockSpec((L, TN), lambda n: (0, n)),
        ),
        compiler_params=pltpu.CompilerParams(
            dimension_semantics=("parallel",),
            vmem_limit_bytes=vmem_limit,
        ),
        cost_estimate=pl.CostEstimate(
            flops=flops, transcendentals=0, bytes_accessed=bytes_accessed
        ),
    )(x2)

    def unpack(y2):
        return jnp.transpose(y2[:, :N].reshape(L, B, C), (1, 0, 2))

    return unpack(res2), unpack(mean2)


def _reference_series_decomp(x, kernel_size):
    # Plain-JAX mirror of the PyTorch MovingAvg + SeriesDecomp forward.
    k = kernel_size
    front_n = k - 1 - (k - 1) // 2
    end_n = (k - 1) // 2
    parts = []
    if front_n:
        parts.append(jnp.repeat(x[:, 0:1, :], front_n, axis=1))
    parts.append(x)
    if end_n:
        parts.append(jnp.repeat(x[:, -1:, :], end_n, axis=1))
    xp = jnp.concatenate(parts, axis=1)                    # (B, L+k-1, C)
    L = x.shape[1]
    mean = sum(xp[:, j:j + L, :] for j in range(k)) / k
    return x - mean, mean


if __name__ == "__main__":
    key = jax.random.PRNGKey(0)
    batch, seq, channels = 2, 16, 32
    x = jax.random.normal(key, (batch, seq, channels), dtype=jnp.float32)

    for kernel_size in (5, 4):   # odd and even windows (even exercises asymmetric padding)
        res, mean = series_decomp(x, kernel_size)
        res = jax.block_until_ready(res)
        mean = jax.block_until_ready(mean)

        ref_res, ref_mean = _reference_series_decomp(x, kernel_size)
        assert res.shape == (batch, seq, channels), res.shape
        assert mean.shape == (batch, seq, channels), mean.shape
        assert res.dtype == x.dtype and mean.dtype == x.dtype
        assert jnp.allclose(mean, ref_mean, atol=1e-5, rtol=1e-5), f"mean mismatch (k={kernel_size})"
        assert jnp.allclose(res, ref_res, atol=1e-5, rtol=1e-5), f"res mismatch (k={kernel_size})"

    print("KERNEL_OK")
</pallas_src>

<mosaic_0001>
module attributes {stable_mosaic.version = 11 : i64} {
  func.func @_series_decomp_kernel(%arg0: i32, %arg1: memref<16x128xf32, #tpu.memory_space<vmem>>, %arg2: memref<16x128xf32, #tpu.memory_space<vmem>>, %arg3: memref<16x128xf32, #tpu.memory_space<vmem>>) attributes {dimension_semantics = [#tpu.dimension_semantics<parallel>], iteration_bounds = array<i64: 1>, scalar_prefetch = 0 : i64, scratch_operands = 0 : i64, tpu.core_type = #tpu.core_type<tc>, window_params = [{transform_indices = @transform_0, window_bounds = array<i64: 16, 128>}, {transform_indices = @transform_1, window_bounds = array<i64: 16, 128>}, {transform_indices = @transform_2, window_bounds = array<i64: 16, 128>}]} {
    %c0 = arith.constant 0 : index
    %c0_0 = arith.constant 0 : index
    %0 = vector.load %arg1[%c0, %c0_0] : memref<16x128xf32, #tpu.memory_space<vmem>>, vector<16x128xf32>
    %1 = vector.extract_strided_slice %0 {offsets = [0, 0], sizes = [1, 128], strides = [1, 1]} : vector<16x128xf32> to vector<1x128xf32>
    %2 = vector.extract_strided_slice %0 {offsets = [15, 0], sizes = [1, 128], strides = [1, 1]} : vector<16x128xf32> to vector<1x128xf32>
    %3 = vector.shape_cast %1 : vector<1x128xf32> to vector<1x128xf32>
    %4 = vector.broadcast %3 : vector<1x128xf32> to vector<2x128xf32>
    %5 = vector.shape_cast %2 : vector<1x128xf32> to vector<1x128xf32>
    %6 = vector.broadcast %5 : vector<1x128xf32> to vector<2x128xf32>
    %7 = tpu.concatenate %4, %0, %6 in 0 : vector<2x128xf32>, vector<16x128xf32>, vector<2x128xf32> -> vector<20x128xf32>
    %8 = vector.extract_strided_slice %7 {offsets = [0, 0], sizes = [16, 128], strides = [1, 1]} : vector<20x128xf32> to vector<16x128xf32>
    %9 = vector.extract_strided_slice %7 {offsets = [1, 0], sizes = [16, 128], strides = [1, 1]} : vector<20x128xf32> to vector<16x128xf32>
    %10 = arith.addf %8, %9 : vector<16x128xf32>
    %11 = vector.extract_strided_slice %7 {offsets = [2, 0], sizes = [16, 128], strides = [1, 1]} : vector<20x128xf32> to vector<16x128xf32>
    %12 = arith.addf %10, %11 : vector<16x128xf32>
    %13 = vector.extract_strided_slice %7 {offsets = [3, 0], sizes = [16, 128], strides = [1, 1]} : vector<20x128xf32> to vector<16x128xf32>
    %14 = arith.addf %12, %13 : vector<16x128xf32>
    %15 = vector.extract_strided_slice %7 {offsets = [4, 0], sizes = [16, 128], strides = [1, 1]} : vector<20x128xf32> to vector<16x128xf32>
    %16 = arith.addf %14, %15 : vector<16x128xf32>
    %cst = arith.constant 2.000000e-01 : f32
    %17 = vector.broadcast %cst : f32 to vector<16x128xf32>
    %18 = arith.mulf %16, %17 : vector<16x128xf32>
    %c0_1 = arith.constant 0 : index
    %c0_2 = arith.constant 0 : index
    %19 = vector.load %arg3[%c0_1, %c0_2] : memref<16x128xf32, #tpu.memory_space<vmem>>, vector<16x128xf32>
    tpu.vector_store %arg3[%c0_1, %c0_2], %18 {strides = array<i32>} : memref<16x128xf32, #tpu.memory_space<vmem>>, vector<16x128xf32>,
    %20 = arith.subf %0, %18 : vector<16x128xf32>
    %c0_3 = arith.constant 0 : index
    %c0_4 = arith.constant 0 : index
    %21 = vector.load %arg2[%c0_3, %c0_4] : memref<16x128xf32, #tpu.memory_space<vmem>>, vector<16x128xf32>
    tpu.vector_store %arg2[%c0_3, %c0_4], %20 {strides = array<i32>} : memref<16x128xf32, #tpu.memory_space<vmem>>, vector<16x128xf32>,
    return
  }
  func.func @transform_0(%arg0: i32) -> (i32, i32) {
    %c0_i32 = arith.constant 0 : i32
    %c0_i32_0 = arith.constant 0 : i32
    return %c0_i32, %arg0 : i32, i32
  }
  func.func @transform_1(%arg0: i32) -> (i32, i32) {
    %c0_i32 = arith.constant 0 : i32
    %c0_i32_0 = arith.constant 0 : i32
    return %c0_i32, %arg0 : i32, i32
  }
  func.func @transform_2(%arg0: i32) -> (i32, i32) {
    %c0_i32 = arith.constant 0 : i32
    %c0_i32_0 = arith.constant 0 : i32
    return %c0_i32, %arg0 : i32, i32
  }
}

</mosaic_0001>

<llo_original>
// kernel: tpu_custom_call.1
$region0: #{tpu_custom_call.1}
  #allocation0 [shape = 'u32[]', space=smem, size = 0x4, offset = 0x4, fixed_abs, tag = 'smem constant byte address 0x4 - core index']
  #allocation1 [shape = 'u32[144,128]{1,0:T(1,128)}', space=vmem, size = 0x12000, scoped, tag = 'internal scratch']
  %s0 = inlined_call_operand.hbm [shape: f32[16,128], index: 0, kind: input, shape index: {}]
  %s1 = inlined_call_operand.hbm [shape: f32[16,128], index: 1, kind: output, shape index: {0}]
  %s2 = inlined_call_operand.hbm [shape: f32[16,128], index: 2, kind: output, shape index: {1}]
  %3 = xla_tuple %s1, %s2
  %s4 = sld [smem:[#allocation0]]
  $region26: #{tpu_custom_call.1} parent=0
    _
  %s6 = ssub.s32 1, %s4
  %s7 = scalar_select 0, %s6, %s4
  $region1: #{tpu_custom_call.1} parent=0
    #allocation2 [shape = 'u8[8192]{0}', space=vmem, size = 0x2000, scoped, tag = 'input window, operand 0, single buffered']
    #allocation3 [shape = 's32[1]{0}', space=sflag, size = 0x4, scoped, tag = 'scoped memory for tpu_custom_call.1']
    #allocation4 [shape = 's32[1]{0}', space=sflag, size = 0x4, scoped, tag = 'scoped memory for tpu_custom_call.1']
    #allocation5 [shape = 'u8[8192]{0}', space=vmem, size = 0x2000, scoped, tag = 'output window, operand 0, single buffered']
    #allocation6 [shape = 'u8[8192]{0}', space=vmem, size = 0x2000, scoped, tag = 'output window, operand 1, single buffered']
    #allocation7 [shape = 's32[1]{0}', space=sflag, size = 0x4, scoped, tag = 'scoped memory for tpu_custom_call.1']
    %8 = vsyncpa [#allocation3], 0
    %9 = vsyncpa [#allocation4], 0
    %10 = vsyncpa [#allocation7], 0
    // Predicated region
    $region2: #{tpu_custom_call.1} parent=1 // pred_check
      _
    $region3: #{tpu_custom_call.1} parent=1 // pred_check_branch
      %12 = sbr.rel (0) target = $region5
    $region4: #{tpu_custom_call.1} parent=1 // pred_region
      %s14 = ssub.s32 256, 256
      %15 = vsyncadd [#allocation3], %s14
      %s16 = sshll.u32 [#allocation2], 4
      %s17 = int_to_ptr.vmem [resolvable:$true] %s16
      %22 = dma.hbm_to_vmem [thread:$0]  %s0, 256, %s17, [#allocation3], 128, 128, 8
    $region5: #{tpu_custom_call.1} parent=1 // pred_fallthru
      _
    // Predicated region
    $region6: #{tpu_custom_call.1} parent=1 // pred_check
      _
    $region7: #{tpu_custom_call.1} parent=1 // pred_check_branch
      %24 = sbr.rel (0) target = $region9
    $region8: #{tpu_custom_call.1} parent=1 // pred_region
      %25 = dma.done [#allocation3], 256
    $region9: #{tpu_custom_call.1} parent=1 // pred_fallthru
      _
    %v26 = vld [vmem:[#allocation2] sm:$0xff]
    %v27 = vld [vmem:[#allocation2 + $0x8] sm:$0xff]
    %v28 = vlaneseq
    %v29 = vshrl.u32 %v28, 7
    %v30 = vsub.s32 0, %v29
    %v31 = vrot.slane %v26, %v30
    %v32 = vlaneseq
    %v33 = vshrl.u32 %v32, 7
    %v34 = vsub.s32 7, %v33
    %v35 = vrot.slane %v27, %v34
    %vm38 = vcmask 1041408
    %v39 = vrot.slane %v26, 6
    %v40 = vrot.slane %v27, 6
    %v41 = vsel %vm38, %v39, %v40
    %v45 = vsel %vm38, %v31, %v39
    %v46 = vsel %vm38, %v40, %v35
    %vm49 = vcmask 1046528
    %v50 = vrot.slane %v45, 1
    %v51 = vrot.slane %v41, 1
    %v52 = vsel %vm49, %v50, %v51
    %v53 = vrot.slane %v46, 1
    %v54 = vsel %vm49, %v51, %v53
    %v57 = vadd.f32 %v45, %v52
    %v58 = vadd.f32 %v41, %v54
    %vm59 = vcmask 1045504
    %v60 = vrot.slane %v45, 2
    %v61 = vrot.slane %v41, 2
    %v62 = vsel %vm59, %v60, %v61
    %v63 = vrot.slane %v46, 2
    %v64 = vsel %vm59, %v61, %v63
    %v67 = vadd.f32 %v57, %v62
    %v68 = vadd.f32 %v58, %v64
    %vm69 = vcmask 1044480
    %v70 = vrot.slane %v45, 3
    %v71 = vrot.slane %v41, 3
    %v72 = vsel %vm69, %v70, %v71
    %v73 = vrot.slane %v46, 3
    %v74 = vsel %vm69, %v71, %v73
    %v77 = vadd.f32 %v67, %v72
    %v78 = vadd.f32 %v68, %v74
    %vm79 = vcmask 1043456
    %v80 = vrot.slane %v45, 4
    %v81 = vrot.slane %v41, 4
    %v82 = vsel %vm79, %v80, %v81
    %v83 = vrot.slane %v46, 4
    %v84 = vsel %vm79, %v81, %v83
    %v87 = vadd.f32 %v77, %v82
    %v88 = vadd.f32 %v78, %v84
    %v89 = vmul.f32 %v87, 0.2
    %v90 = vmul.f32 %v88, 0.2
    %91 = vst [vmem:[#allocation6] sm:$0xff] %v89
    %92 = vst [vmem:[#allocation6 + $0x8] sm:$0xff] %v90
    %v93 = vsub.f32 %v26, %v89
    %v94 = vsub.f32 %v27, %v90
    %95 = vst [vmem:[#allocation5] sm:$0xff] %v93
    %96 = vst [vmem:[#allocation5 + $0x8] sm:$0xff] %v94
    // Predicated region
    $region10: #{tpu_custom_call.1} parent=1 // pred_check
      _
    $region11: #{tpu_custom_call.1} parent=1 // pred_check_branch
      %98 = sbr.rel (0) target = $region13
    $region12: #{tpu_custom_call.1} parent=1 // pred_region
      %s100 = ssub.s32 256, 256
      %101 = vsyncadd [#allocation4], %s100
      %s102 = sshll.u32 [#allocation5], 4
      %s103 = int_to_ptr.vmem [resolvable:$true] %s102
      %108 = dma.vmem_to_hbm [thread:$0]  %s103, 256, %s1, [#allocation4], 128, 128, 8
    $region13: #{tpu_custom_call.1} parent=1 // pred_fallthru
      _
    // Predicated region
    $region14: #{tpu_custom_call.1} parent=1 // pred_check
      _
    $region15: #{tpu_custom_call.1} parent=1 // pred_check_branch
      %110 = sbr.rel (0) target = $region17
    $region16: #{tpu_custom_call.1} parent=1 // pred_region
      %s112 = ssub.s32 256, 256
      %113 = vsyncadd [#allocation7], %s112
      %s114 = sshll.u32 [#allocation6], 4
      %s115 = int_to_ptr.vmem [resolvable:$true] %s114
      %120 = dma.vmem_to_hbm [thread:$0]  %s115, 256, %s2, [#allocation7], 128, 128, 8
    $region17: #{tpu_custom_call.1} parent=1 // pred_fallthru
      _
    // Predicated region
    $region18: #{tpu_custom_call.1} parent=1 // pred_check
      _
    $region19: #{tpu_custom_call.1} parent=1 // pred_check_branch
      %122 = sbr.rel (0) target = $region21
    $region20: #{tpu_custom_call.1} parent=1 // pred_region
      %123 = dma.done [#allocation4], 256
    $region21: #{tpu_custom_call.1} parent=1 // pred_fallthru
      _
    // Predicated region
    $region22: #{tpu_custom_call.1} parent=1 // pred_check
      _
    $region23: #{tpu_custom_call.1} parent=1 // pred_check_branch
      %125 = sbr.rel (0) target = $region25
    $region24: #{tpu_custom_call.1} parent=1 // pred_region
      %126 = dma.done [#allocation7], 256
    $region25: #{tpu_custom_call.1} parent=1 // pred_fallthru
      _
    %127 = vsyncpa [#allocation3], 1
    %128 = vsyncpa [#allocation4], 1
    %129 = vsyncpa [#allocation7], 1

</llo_original>
